<compile_context>
chip_gen: v6e
topology: v6e:2x2x1
jax: 0.10.0
libtpu: 0.0.40
codegen_flags: <defaults>
</compile_context>

<pallas_src>
import jax
import jax.numpy as jnp
from jax import lax
from jax.experimental import pallas as pl
from jax.experimental.pallas import tpu as pltpu


def _make_bottleneck_kernel(H, W, P):
    HW = H * W
    PADW = W + 1  # halo so vertical out-of-range taps land in zeros

    def kernel(x_ref, w1_ref, s1_ref, b1_ref,
               w2_ref, s2_ref, b2_ref,
               w3_ref, s3_ref, b3_ref,
               o_ref, hpad_ref, patches_ref):
        x = x_ref[0]                                          # (Cin, HW)

        # ---- conv1 (1x1) + bn1 + relu : (P, Cin) @ (Cin, HW) on the MXU.
        h1 = jnp.dot(w1_ref[...], x, preferred_element_type=jnp.float32)
        h1 = jnp.maximum(h1 * s1_ref[...] + b1_ref[...], 0.0)    # (P, HW)

        # ---- conv2 (3x3, stride 1, dilation 1, padding 1) as ONE matmul.
        # Flattened zero halo: [PADW zeros | h1 | PADW zeros].  Only the two
        # small halo strips are re-zeroed; the interior is fully overwritten
        # every grid step (parallel-grid safe).
        hpad_ref[:, 0:PADW] = jnp.zeros((P, PADW), jnp.float32)
        hpad_ref[:, PADW + HW:PADW + HW + PADW] = jnp.zeros((P, PADW),
                                                            jnp.float32)
        hpad_ref[:, PADW:PADW + HW] = h1

        # Column index of every flattened position (for horizontal masks).
        col = lax.broadcasted_iota(jnp.int32, (1, HW), 1) % W

        # im2col: stack the 9 shifted taps along K -> (9*P, HW).
        for t in range(9):
            oi, oj = t // 3 - 1, t % 3 - 1         # tap offsets in (H, W)
            s = oi * W + oj
            patch = hpad_ref[:, PADW + s:PADW + s + HW]   # static lane slice
            if oj == -1:      # left neighbour invalid at x == 0
                patch = jnp.where(col >= 1, patch, 0.0)
            elif oj == 1:     # right neighbour invalid at x == W-1
                patch = jnp.where(col <= W - 2, patch, 0.0)
            patches_ref[t * P:(t + 1) * P, :] = patch

        h2 = jnp.dot(w2_ref[...], patches_ref[...],
                     preferred_element_type=jnp.float32)   # (P,9P)@(9P,HW)
        h2 = jnp.maximum(h2 * s2_ref[...] + b2_ref[...], 0.0)    # (P, HW)

        # ---- conv3 (1x1) + bn3 + identity residual + relu.
        h3 = jnp.dot(w3_ref[...], h2, preferred_element_type=jnp.float32)
        h3 = h3 * s3_ref[...] + b3_ref[...]                       # (4P, HW)
        o_ref[0] = jnp.maximum(h3 + x, 0.0)

    return kernel


def bottleneck(x_nchw, w1_oihw, s1, b1, w2_oihw, s2, b2, w3_oihw, s3, b3):
    """Bottleneck forward (stride=1, dilation=1, downsample=None, eval BN)."""
    N, Cin, H, W = x_nchw.shape
    P = w1_oihw.shape[0]
    Cout = w3_oihw.shape[0]
    HW = H * W

    # This kernel implements the identity-residual configuration only.
    assert Cout == 4 * P and Cout == Cin, \
        "requires inplanes == 4*planes and no downsample"
    assert w2_oihw.shape == (P, P, 3, 3), "conv2 must be 3x3"
    assert HW % 128 == 0 and Cin % 8 == 0, \
        "demo kernel assumes lane/sublane-aligned flattened spatial / channels"

    # Lane-dense activations: (N, C, H*W), spatial on the 128-lane axis.
    x_flat = x_nchw.reshape(N, Cin, HW)

    # Weights as plain matmul operands (prepared once, outside the kernel).
    w1m = w1_oihw.reshape(P, Cin)                                  # (P, Cin)
    # (O, I, KH, KW) -> (O, KH, KW, I) -> (P, 9P); K index = (kh*3+kw)*P + ci
    w2m = jnp.transpose(w2_oihw, (0, 2, 3, 1)).reshape(P, 9 * P)
    w3m = w3_oihw.reshape(Cout, P)                                 # (4P, P)

    def cvec(v):  # per-channel scale/bias, broadcast along lanes
        return v.reshape(-1, 1).astype(jnp.float32)

    kernel = _make_bottleneck_kernel(H, W, P)
    grid_spec = pltpu.PrefetchScalarGridSpec(
        num_scalar_prefetch=0,
        grid=(N,),
        in_specs=[
            pl.BlockSpec((1, Cin, HW), lambda n: (n, 0, 0)),   # x
            pl.BlockSpec((P, Cin), lambda n: (0, 0)),          # w1
            pl.BlockSpec((P, 1), lambda n: (0, 0)),            # s1
            pl.BlockSpec((P, 1), lambda n: (0, 0)),            # b1
            pl.BlockSpec((P, 9 * P), lambda n: (0, 0)),        # w2 (im2col)
            pl.BlockSpec((P, 1), lambda n: (0, 0)),            # s2
            pl.BlockSpec((P, 1), lambda n: (0, 0)),            # b2
            pl.BlockSpec((Cout, P), lambda n: (0, 0)),         # w3
            pl.BlockSpec((Cout, 1), lambda n: (0, 0)),         # s3
            pl.BlockSpec((Cout, 1), lambda n: (0, 0)),         # b3
        ],
        out_specs=pl.BlockSpec((1, Cout, HW), lambda n: (n, 0, 0)),
        scratch_shapes=[
            pltpu.VMEM((P, HW + 2 * (W + 1)), jnp.float32),    # haloed h1
            pltpu.VMEM((9 * P, HW), jnp.float32),              # im2col patches
        ],
    )
    out_flat = pl.pallas_call(
        kernel,
        out_shape=jax.ShapeDtypeStruct((N, Cout, HW), jnp.float32),
        grid_spec=grid_spec,
        compiler_params=pltpu.CompilerParams(
            # each batch element is independent -> megacore sharding on v7x
            dimension_semantics=("parallel",)),
    )(x_flat, w1m, cvec(s1), cvec(b1), w2m, cvec(s2), cvec(b2),
      w3m, cvec(s3), cvec(b3))
    return out_flat.reshape(N, Cout, H, W)


def reference_nchw(x, w1, s1, b1, w2, s2, b2, w3, s3, b3):
    dn = ('NCHW', 'OIHW', 'NCHW')

    def bn(h, s, b):
        return h * s.reshape(1, -1, 1, 1) + b.reshape(1, -1, 1, 1)

    h = lax.conv_general_dilated(x, w1, (1, 1), 'VALID', dimension_numbers=dn)
    h = jnp.maximum(bn(h, s1, b1), 0.0)
    h = lax.conv_general_dilated(h, w2, (1, 1), ((1, 1), (1, 1)),
                                 dimension_numbers=dn)
    h = jnp.maximum(bn(h, s2, b2), 0.0)
    h = lax.conv_general_dilated(h, w3, (1, 1), 'VALID', dimension_numbers=dn)
    h = bn(h, s3, b3)
    return jnp.maximum(h + x, 0.0)


if __name__ == "__main__":
    # Bottleneck(inplanes=16, planes=4, stride=1, dilation=1, downsample=None)
    # -> out channels = 4 * planes = 16 = inplanes (identity residual).
    N, Cin, H, W = 2, 16, 16, 16
    planes = 4

    key = jax.random.PRNGKey(0)
    keys = jax.random.split(key, 10)
    x = jax.random.normal(keys[0], (N, Cin, H, W), jnp.float32)

    def bn_fold(kg, kb, C):
        gamma = jax.random.uniform(kg, (C,), jnp.float32, 0.5, 1.5)
        beta = jax.random.normal(kb, (C,), jnp.float32) * 0.1
        running_mean = jnp.zeros((C,), jnp.float32)   # PyTorch default init
        running_var = jnp.ones((C,), jnp.float32)
        eps = 1e-5
        scale = gamma / jnp.sqrt(running_var + eps)
        bias = beta - running_mean * scale
        return scale, bias

    # Conv weights in the PyTorch OIHW convention.
    w1 = jax.random.normal(keys[1], (planes, Cin, 1, 1), jnp.float32) * 0.1
    w2 = jax.random.normal(keys[2], (planes, planes, 3, 3), jnp.float32) * 0.1
    w3 = jax.random.normal(keys[3], (4 * planes, planes, 1, 1),
                           jnp.float32) * 0.1
    s1, b1 = bn_fold(keys[4], keys[5], planes)
    s2, b2 = bn_fold(keys[6], keys[7], planes)
    s3, b3 = bn_fold(keys[8], keys[9], 4 * planes)

    out = bottleneck(x, w1, s1, b1, w2, s2, b2, w3, s3, b3)
    jax.block_until_ready(out)

    expected = reference_nchw(x, w1, s1, b1, w2, s2, b2, w3, s3, b3)
    assert jnp.allclose(out, expected, atol=1e-4, rtol=1e-4), \
        "Pallas Bottleneck mismatch vs JAX reference"
    print("KERNEL_OK")
</pallas_src>

<mosaic_0001>
module attributes {stable_mosaic.version = 11 : i64} {
  func.func @kernel(%arg0: i32, %arg1: memref<1x16x256xf32, #tpu.memory_space<vmem>>, %arg2: memref<4x16xf32, #tpu.memory_space<vmem>>, %arg3: memref<4x1xf32, #tpu.memory_space<vmem>>, %arg4: memref<4x1xf32, #tpu.memory_space<vmem>>, %arg5: memref<4x36xf32, #tpu.memory_space<vmem>>, %arg6: memref<4x1xf32, #tpu.memory_space<vmem>>, %arg7: memref<4x1xf32, #tpu.memory_space<vmem>>, %arg8: memref<16x4xf32, #tpu.memory_space<vmem>>, %arg9: memref<16x1xf32, #tpu.memory_space<vmem>>, %arg10: memref<16x1xf32, #tpu.memory_space<vmem>>, %arg11: memref<1x16x256xf32, #tpu.memory_space<vmem>>, %arg12: memref<4x290xf32, #tpu.memory_space<vmem>>, %arg13: memref<36x256xf32, #tpu.memory_space<vmem>>) attributes {dimension_semantics = [#tpu.dimension_semantics<parallel>], iteration_bounds = array<i64: 2>, scalar_prefetch = 0 : i64, scratch_operands = 2 : i64, tpu.core_type = #tpu.core_type<tc>, window_params = [{transform_indices = @transform_0, window_bounds = array<i64: 1, 16, 256>}, {pipeline_mode = #tpu.pipeline_mode<synchronous>, transform_indices = @transform_1, window_bounds = array<i64: 4, 16>}, {pipeline_mode = #tpu.pipeline_mode<synchronous>, transform_indices = @transform_2, window_bounds = array<i64: 4, 1>}, {pipeline_mode = #tpu.pipeline_mode<synchronous>, transform_indices = @transform_3, window_bounds = array<i64: 4, 1>}, {pipeline_mode = #tpu.pipeline_mode<synchronous>, transform_indices = @transform_4, window_bounds = array<i64: 4, 36>}, {pipeline_mode = #tpu.pipeline_mode<synchronous>, transform_indices = @transform_5, window_bounds = array<i64: 4, 1>}, {pipeline_mode = #tpu.pipeline_mode<synchronous>, transform_indices = @transform_6, window_bounds = array<i64: 4, 1>}, {pipeline_mode = #tpu.pipeline_mode<synchronous>, transform_indices = @transform_7, window_bounds = array<i64: 16, 4>}, {pipeline_mode = #tpu.pipeline_mode<synchronous>, transform_indices = @transform_8, window_bounds = array<i64: 16, 1>}, {pipeline_mode = #tpu.pipeline_mode<synchronous>, transform_indices = @transform_9, window_bounds = array<i64: 16, 1>}, {transform_indices = @transform_10, window_bounds = array<i64: 1, 16, 256>}]} {
    %c0 = arith.constant 0 : index
    %c0_0 = arith.constant 0 : index
    %c0_1 = arith.constant 0 : index
    %0 = vector.load %arg1[%c0, %c0_0, %c0_1] : memref<1x16x256xf32, #tpu.memory_space<vmem>>, vector<1x16x256xf32>
    %1 = vector.shape_cast %0 : vector<1x16x256xf32> to vector<16x256xf32>
    %c0_2 = arith.constant 0 : index
    %c0_3 = arith.constant 0 : index
    %2 = vector.load %arg2[%c0_2, %c0_3] : memref<4x16xf32, #tpu.memory_space<vmem>>, vector<4x16xf32>
    %cst = arith.constant dense<0.000000e+00> : vector<4x256xf32>
    %3 = tpu.matmul %2, %1, %cst {dimension_numbers = #tpu.dot_dimension_numbers<[1], [0], [0], [1], [0, 0, 1, 1], [], []>} : vector<4x16xf32>, vector<16x256xf32>, vector<4x256xf32> -> vector<4x256xf32>
    %c0_4 = arith.constant 0 : index
    %c0_5 = arith.constant 0 : index
    %4 = vector.load %arg3[%c0_4, %c0_5] : memref<4x1xf32, #tpu.memory_space<vmem>>, vector<4x1xf32>
    %5 = vector.broadcast %4 : vector<4x1xf32> to vector<4x256xf32>
    %6 = arith.mulf %3, %5 : vector<4x256xf32>
    %c0_6 = arith.constant 0 : index
    %c0_7 = arith.constant 0 : index
    %7 = vector.load %arg4[%c0_6, %c0_7] : memref<4x1xf32, #tpu.memory_space<vmem>>, vector<4x1xf32>
    %8 = vector.broadcast %7 : vector<4x1xf32> to vector<4x256xf32>
    %9 = arith.addf %6, %8 : vector<4x256xf32>
    %cst_8 = arith.constant 0.000000e+00 : f32
    %10 = vector.broadcast %cst_8 : f32 to vector<4x256xf32>
    %11 = arith.maximumf %9, %10 : vector<4x256xf32>
    %cst_9 = arith.constant 0.000000e+00 : f32
    %12 = vector.broadcast %cst_9 : f32 to vector<4x17xf32>
    %c0_10 = arith.constant 0 : index
    %c0_11 = arith.constant 0 : index
    %13 = vector.load %arg12[%c0_10, %c0_11] : memref<4x290xf32, #tpu.memory_space<vmem>>, vector<4x17xf32>
    tpu.vector_store %arg12[%c0_10, %c0_11], %12 {strides = array<i32>} : memref<4x290xf32, #tpu.memory_space<vmem>>, vector<4x17xf32>,
    %cst_12 = arith.constant 0.000000e+00 : f32
    %14 = vector.broadcast %cst_12 : f32 to vector<4x17xf32>
    %c0_13 = arith.constant 0 : index
    %c273 = arith.constant 273 : index
    %15 = vector.load %arg12[%c0_13, %c273] : memref<4x290xf32, #tpu.memory_space<vmem>>, vector<4x17xf32>
    tpu.vector_store %arg12[%c0_13, %c273], %14 {strides = array<i32>} : memref<4x290xf32, #tpu.memory_space<vmem>>, vector<4x17xf32>,
    %c0_14 = arith.constant 0 : index
    %c17 = arith.constant 17 : index
    %16 = vector.load %arg12[%c0_14, %c17] : memref<4x290xf32, #tpu.memory_space<vmem>>, vector<4x256xf32>
    tpu.vector_store %arg12[%c0_14, %c17], %11 {strides = array<i32>} : memref<4x290xf32, #tpu.memory_space<vmem>>, vector<4x256xf32>,
    %17 = tpu.iota {dimensions = array<i32: 1>} : vector<1x256xi32>
    %c16_i32 = arith.constant 16 : i32
    %c0_i32 = arith.constant 0 : i32
    %18 = arith.cmpi eq, %c16_i32, %c0_i32 : i32
    %c1_i32 = arith.constant 1 : i32
    %19 = arith.select %18, %c1_i32, %c16_i32 : i32
    %20 = vector.broadcast %19 : i32 to vector<1x256xi32>
    %21 = arith.remsi %17, %20 : vector<1x256xi32>
    %c0_i32_15 = arith.constant 0 : i32
    %22 = vector.broadcast %c0_i32_15 : i32 to vector<1x256xi32>
    %23 = arith.cmpi ne, %21, %22 : vector<1x256xi32>
    %c0_i32_16 = arith.constant 0 : i32
    %24 = vector.broadcast %c0_i32_16 : i32 to vector<1x256xi32>
    %25 = arith.cmpi slt, %21, %24 : vector<1x256xi32>
    %c0_i32_17 = arith.constant 0 : i32
    %26 = arith.cmpi slt, %19, %c0_i32_17 : i32
    %27 = vector.broadcast %26 : i1 to vector<1x256xi1>
    %28 = vector.broadcast %27 : vector<1x256xi1> to vector<1x256xi1>
    %29 = arith.xori %25, %28 : vector<1x256xi1>
    %30 = arith.andi %29, %23 : vector<1x256xi1>
    %31 = vector.broadcast %19 : i32 to vector<1x256xi32>
    %32 = arith.addi %21, %31 : vector<1x256xi32>
    %33 = arith.select %30, %32, %21 : vector<1x256xi1>, vector<1x256xi32>
    %c0_18 = arith.constant 0 : index
    %c0_19 = arith.constant 0 : index
    %34 = vector.load %arg12[%c0_18, %c0_19] : memref<4x290xf32, #tpu.memory_space<vmem>>, vector<4x256xf32>
    %c1_i32_20 = arith.constant 1 : i32
    %35 = vector.broadcast %c1_i32_20 : i32 to vector<1x256xi32>
    %36 = arith.cmpi sge, %33, %35 : vector<1x256xi32>
    %cst_21 = arith.constant 0.000000e+00 : f32
    %37 = vector.shape_cast %36 : vector<1x256xi1> to vector<1x256xi1>
    %38 = vector.broadcast %37 : vector<1x256xi1> to vector<4x256xi1>
    %39 = vector.broadcast %cst_21 : f32 to vector<4x256xf32>
    %40 = arith.select %38, %34, %39 : vector<4x256xi1>, vector<4x256xf32>
    %c0_22 = arith.constant 0 : index
    %c0_23 = arith.constant 0 : index
    %41 = vector.load %arg13[%c0_22, %c0_23] : memref<36x256xf32, #tpu.memory_space<vmem>>, vector<4x256xf32>
    tpu.vector_store %arg13[%c0_22, %c0_23], %40 {strides = array<i32>} : memref<36x256xf32, #tpu.memory_space<vmem>>, vector<4x256xf32>,
    %c0_24 = arith.constant 0 : index
    %c1 = arith.constant 1 : index
    %42 = vector.load %arg12[%c0_24, %c1] : memref<4x290xf32, #tpu.memory_space<vmem>>, vector<4x256xf32>
    %c4 = arith.constant 4 : index
    %c0_25 = arith.constant 0 : index
    %43 = vector.load %arg13[%c4, %c0_25] : memref<36x256xf32, #tpu.memory_space<vmem>>, vector<4x256xf32>
    tpu.vector_store %arg13[%c4, %c0_25], %42 {strides = array<i32>} : memref<36x256xf32, #tpu.memory_space<vmem>>, vector<4x256xf32>,
    %c0_26 = arith.constant 0 : index
    %c2 = arith.constant 2 : index
    %44 = vector.load %arg12[%c0_26, %c2] : memref<4x290xf32, #tpu.memory_space<vmem>>, vector<4x256xf32>
    %c14_i32 = arith.constant 14 : i32
    %45 = vector.broadcast %c14_i32 : i32 to vector<1x256xi32>
    %46 = arith.cmpi sle, %33, %45 : vector<1x256xi32>
    %cst_27 = arith.constant 0.000000e+00 : f32
    %47 = vector.shape_cast %46 : vector<1x256xi1> to vector<1x256xi1>
    %48 = vector.broadcast %47 : vector<1x256xi1> to vector<4x256xi1>
    %49 = vector.broadcast %cst_27 : f32 to vector<4x256xf32>
    %50 = arith.select %48, %44, %49 : vector<4x256xi1>, vector<4x256xf32>
    %c8 = arith.constant 8 : index
    %c0_28 = arith.constant 0 : index
    %51 = vector.load %arg13[%c8, %c0_28] : memref<36x256xf32, #tpu.memory_space<vmem>>, vector<4x256xf32>
    tpu.vector_store %arg13[%c8, %c0_28], %50 {strides = array<i32>} : memref<36x256xf32, #tpu.memory_space<vmem>>, vector<4x256xf32>,
    %c0_29 = arith.constant 0 : index
    %c16 = arith.constant 16 : index
    %52 = vector.load %arg12[%c0_29, %c16] : memref<4x290xf32, #tpu.memory_space<vmem>>, vector<4x256xf32>
    %c1_i32_30 = arith.constant 1 : i32
    %53 = vector.broadcast %c1_i32_30 : i32 to vector<1x256xi32>
    %54 = arith.cmpi sge, %33, %53 : vector<1x256xi32>
    %cst_31 = arith.constant 0.000000e+00 : f32
    %55 = vector.shape_cast %54 : vector<1x256xi1> to vector<1x256xi1>
    %56 = vector.broadcast %55 : vector<1x256xi1> to vector<4x256xi1>
    %57 = vector.broadcast %cst_31 : f32 to vector<4x256xf32>
    %58 = arith.select %56, %52, %57 : vector<4x256xi1>, vector<4x256xf32>
    %c12 = arith.constant 12 : index
    %c0_32 = arith.constant 0 : index
    %59 = vector.load %arg13[%c12, %c0_32] : memref<36x256xf32, #tpu.memory_space<vmem>>, vector<4x256xf32>
    tpu.vector_store %arg13[%c12, %c0_32], %58 {strides = array<i32>} : memref<36x256xf32, #tpu.memory_space<vmem>>, vector<4x256xf32>,
    %c0_33 = arith.constant 0 : index
    %c17_34 = arith.constant 17 : index
    %60 = vector.load %arg12[%c0_33, %c17_34] : memref<4x290xf32, #tpu.memory_space<vmem>>, vector<4x256xf32>
    %c16_35 = arith.constant 16 : index
    %c0_36 = arith.constant 0 : index
    %61 = vector.load %arg13[%c16_35, %c0_36] : memref<36x256xf32, #tpu.memory_space<vmem>>, vector<4x256xf32>
    tpu.vector_store %arg13[%c16_35, %c0_36], %60 {strides = array<i32>} : memref<36x256xf32, #tpu.memory_space<vmem>>, vector<4x256xf32>,
    %c0_37 = arith.constant 0 : index
    %c18 = arith.constant 18 : index
    %62 = vector.load %arg12[%c0_37, %c18] : memref<4x290xf32, #tpu.memory_space<vmem>>, vector<4x256xf32>
    %c14_i32_38 = arith.constant 14 : i32
    %63 = vector.broadcast %c14_i32_38 : i32 to vector<1x256xi32>
    %64 = arith.cmpi sle, %33, %63 : vector<1x256xi32>
    %cst_39 = arith.constant 0.000000e+00 : f32
    %65 = vector.shape_cast %64 : vector<1x256xi1> to vector<1x256xi1>
    %66 = vector.broadcast %65 : vector<1x256xi1> to vector<4x256xi1>
    %67 = vector.broadcast %cst_39 : f32 to vector<4x256xf32>
    %68 = arith.select %66, %62, %67 : vector<4x256xi1>, vector<4x256xf32>
    %c20 = arith.constant 20 : index
    %c0_40 = arith.constant 0 : index
    %69 = vector.load %arg13[%c20, %c0_40] : memref<36x256xf32, #tpu.memory_space<vmem>>, vector<4x256xf32>
    tpu.vector_store %arg13[%c20, %c0_40], %68 {strides = array<i32>} : memref<36x256xf32, #tpu.memory_space<vmem>>, vector<4x256xf32>,
    %c0_41 = arith.constant 0 : index
    %c32 = arith.constant 32 : index
    %70 = vector.load %arg12[%c0_41, %c32] : memref<4x290xf32, #tpu.memory_space<vmem>>, vector<4x256xf32>
    %c1_i32_42 = arith.constant 1 : i32
    %71 = vector.broadcast %c1_i32_42 : i32 to vector<1x256xi32>
    %72 = arith.cmpi sge, %33, %71 : vector<1x256xi32>
    %cst_43 = arith.constant 0.000000e+00 : f32
    %73 = vector.shape_cast %72 : vector<1x256xi1> to vector<1x256xi1>
    %74 = vector.broadcast %73 : vector<1x256xi1> to vector<4x256xi1>
    %75 = vector.broadcast %cst_43 : f32 to vector<4x256xf32>
    %76 = arith.select %74, %70, %75 : vector<4x256xi1>, vector<4x256xf32>
    %c24 = arith.constant 24 : index
    %c0_44 = arith.constant 0 : index
    %77 = vector.load %arg13[%c24, %c0_44] : memref<36x256xf32, #tpu.memory_space<vmem>>, vector<4x256xf32>
    tpu.vector_store %arg13[%c24, %c0_44], %76 {strides = array<i32>} : memref<36x256xf32, #tpu.memory_space<vmem>>, vector<4x256xf32>,
    %c0_45 = arith.constant 0 : index
    %c33 = arith.constant 33 : index
    %78 = vector.load %arg12[%c0_45, %c33] : memref<4x290xf32, #tpu.memory_space<vmem>>, vector<4x256xf32>
    %c28 = arith.constant 28 : index
    %c0_46 = arith.constant 0 : index
    %79 = vector.load %arg13[%c28, %c0_46] : memref<36x256xf32, #tpu.memory_space<vmem>>, vector<4x256xf32>
    tpu.vector_store %arg13[%c28, %c0_46], %78 {strides = array<i32>} : memref<36x256xf32, #tpu.memory_space<vmem>>, vector<4x256xf32>,
    %c0_47 = arith.constant 0 : index
    %c34 = arith.constant 34 : index
    %80 = vector.load %arg12[%c0_47, %c34] : memref<4x290xf32, #tpu.memory_space<vmem>>, vector<4x256xf32>
    %c14_i32_48 = arith.constant 14 : i32
    %81 = vector.broadcast %c14_i32_48 : i32 to vector<1x256xi32>
    %82 = arith.cmpi sle, %33, %81 : vector<1x256xi32>
    %cst_49 = arith.constant 0.000000e+00 : f32
    %83 = vector.shape_cast %82 : vector<1x256xi1> to vector<1x256xi1>
    %84 = vector.broadcast %83 : vector<1x256xi1> to vector<4x256xi1>
    %85 = vector.broadcast %cst_49 : f32 to vector<4x256xf32>
    %86 = arith.select %84, %80, %85 : vector<4x256xi1>, vector<4x256xf32>
    %c32_50 = arith.constant 32 : index
    %c0_51 = arith.constant 0 : index
    %87 = vector.load %arg13[%c32_50, %c0_51] : memref<36x256xf32, #tpu.memory_space<vmem>>, vector<4x256xf32>
    tpu.vector_store %arg13[%c32_50, %c0_51], %86 {strides = array<i32>} : memref<36x256xf32, #tpu.memory_space<vmem>>, vector<4x256xf32>,
    %c0_52 = arith.constant 0 : index
    %c0_53 = arith.constant 0 : index
    %88 = vector.load %arg5[%c0_52, %c0_53] : memref<4x36xf32, #tpu.memory_space<vmem>>, vector<4x36xf32>
    %c0_54 = arith.constant 0 : index
    %c0_55 = arith.constant 0 : index
    %89 = vector.load %arg13[%c0_54, %c0_55] : memref<36x256xf32, #tpu.memory_space<vmem>>, vector<36x256xf32>
    %cst_56 = arith.constant dense<0.000000e+00> : vector<4x256xf32>
    %90 = tpu.matmul %88, %89, %cst_56 {dimension_numbers = #tpu.dot_dimension_numbers<[1], [0], [0], [1], [0, 0, 1, 1], [], []>} : vector<4x36xf32>, vector<36x256xf32>, vector<4x256xf32> -> vector<4x256xf32>
    %c0_57 = arith.constant 0 : index
    %c0_58 = arith.constant 0 : index
    %91 = vector.load %arg6[%c0_57, %c0_58] : memref<4x1xf32, #tpu.memory_space<vmem>>, vector<4x1xf32>
    %92 = vector.broadcast %91 : vector<4x1xf32> to vector<4x256xf32>
    %93 = arith.mulf %90, %92 : vector<4x256xf32>
    %c0_59 = arith.constant 0 : index
    %c0_60 = arith.constant 0 : index
    %94 = vector.load %arg7[%c0_59, %c0_60] : memref<4x1xf32, #tpu.memory_space<vmem>>, vector<4x1xf32>
    %95 = vector.broadcast %94 : vector<4x1xf32> to vector<4x256xf32>
    %96 = arith.addf %93, %95 : vector<4x256xf32>
    %cst_61 = arith.constant 0.000000e+00 : f32
    %97 = vector.broadcast %cst_61 : f32 to vector<4x256xf32>
    %98 = arith.maximumf %96, %97 : vector<4x256xf32>
    %c0_62 = arith.constant 0 : index
    %c0_63 = arith.constant 0 : index
    %99 = vector.load %arg8[%c0_62, %c0_63] : memref<16x4xf32, #tpu.memory_space<vmem>>, vector<16x4xf32>
    %cst_64 = arith.constant dense<0.000000e+00> : vector<16x256xf32>
    %100 = tpu.matmul %99, %98, %cst_64 {dimension_numbers = #tpu.dot_dimension_numbers<[1], [0], [0], [1], [0, 0, 1, 1], [], []>} : vector<16x4xf32>, vector<4x256xf32>, vector<16x256xf32> -> vector<16x256xf32>
    %c0_65 = arith.constant 0 : index
    %c0_66 = arith.constant 0 : index
    %101 = vector.load %arg9[%c0_65, %c0_66] : memref<16x1xf32, #tpu.memory_space<vmem>>, vector<16x1xf32>
    %102 = vector.broadcast %101 : vector<16x1xf32> to vector<16x256xf32>
    %103 = arith.mulf %100, %102 : vector<16x256xf32>
    %c0_67 = arith.constant 0 : index
    %c0_68 = arith.constant 0 : index
    %104 = vector.load %arg10[%c0_67, %c0_68] : memref<16x1xf32, #tpu.memory_space<vmem>>, vector<16x1xf32>
    %105 = vector.broadcast %104 : vector<16x1xf32> to vector<16x256xf32>
    %106 = arith.addf %103, %105 : vector<16x256xf32>
    %107 = arith.addf %106, %1 : vector<16x256xf32>
    %cst_69 = arith.constant 0.000000e+00 : f32
    %108 = vector.broadcast %cst_69 : f32 to vector<16x256xf32>
    %109 = arith.maximumf %107, %108 : vector<16x256xf32>
    %c0_70 = arith.constant 0 : index
    %c0_71 = arith.constant 0 : index
    %c0_72 = arith.constant 0 : index
    %110 = vector.load %arg11[%c0_70, %c0_71, %c0_72] : memref<1x16x256xf32, #tpu.memory_space<vmem>>, vector<1x16x256xf32>
    %111 = vector.shape_cast %110 : vector<1x16x256xf32> to vector<16x256xf32>
    %112 = vector.shape_cast %109 : vector<16x256xf32> to vector<1x16x256xf32>
    tpu.vector_store %arg11[%c0_70, %c0_71, %c0_72], %112 {strides = array<i32>} : memref<1x16x256xf32, #tpu.memory_space<vmem>>, vector<1x16x256xf32>,
    return
  }
  func.func @transform_0(%arg0: i32) -> (i32, i32, i32) {
    %c0_i32 = arith.constant 0 : i32
    %c0_i32_0 = arith.constant 0 : i32
    %c0_i32_1 = arith.constant 0 : i32
    return %arg0, %c0_i32, %c0_i32_0 : i32, i32, i32
  }
  func.func @transform_1(%arg0: i32) -> (i32, i32) {
    %c0_i32 = arith.constant 0 : i32
    %c0_i32_0 = arith.constant 0 : i32
    %c0_i32_1 = arith.constant 0 : i32
    return %c0_i32, %c0_i32_0 : i32, i32
  }
  func.func @transform_2(%arg0: i32) -> (i32, i32) {
    %c0_i32 = arith.constant 0 : i32
    %c0_i32_0 = arith.constant 0 : i32
    %c0_i32_1 = arith.constant 0 : i32
    return %c0_i32, %c0_i32_0 : i32, i32
  }
  func.func @transform_3(%arg0: i32) -> (i32, i32) {
    %c0_i32 = arith.constant 0 : i32
    %c0_i32_0 = arith.constant 0 : i32
    %c0_i32_1 = arith.constant 0 : i32
    return %c0_i32, %c0_i32_0 : i32, i32
  }
  func.func @transform_4(%arg0: i32) -> (i32, i32) {
    %c0_i32 = arith.constant 0 : i32
    %c0_i32_0 = arith.constant 0 : i32
    %c0_i32_1 = arith.constant 0 : i32
    return %c0_i32, %c0_i32_0 : i32, i32
  }
  func.func @transform_5(%arg0: i32) -> (i32, i32) {
    %c0_i32 = arith.constant 0 : i32
    %c0_i32_0 = arith.constant 0 : i32
    %c0_i32_1 = arith.constant 0 : i32
    return %c0_i32, %c0_i32_0 : i32, i32
  }
  func.func @transform_6(%arg0: i32) -> (i32, i32) {
    %c0_i32 = arith.constant 0 : i32
    %c0_i32_0 = arith.constant 0 : i32
    %c0_i32_1 = arith.constant 0 : i32
    return %c0_i32, %c0_i32_0 : i32, i32
  }
  func.func @transform_7(%arg0: i32) -> (i32, i32) {
    %c0_i32 = arith.constant 0 : i32
    %c0_i32_0 = arith.constant 0 : i32
    %c0_i32_1 = arith.constant 0 : i32
    return %c0_i32, %c0_i32_0 : i32, i32
  }
  func.func @transform_8(%arg0: i32) -> (i32, i32) {
    %c0_i32 = arith.constant 0 : i32
    %c0_i32_0 = arith.constant 0 : i32
    %c0_i32_1 = arith.constant 0 : i32
    return %c0_i32, %c0_i32_0 : i32, i32
  }
  func.func @transform_9(%arg0: i32) -> (i32, i32) {
    %c0_i32 = arith.constant 0 : i32
    %c0_i32_0 = arith.constant 0 : i32
    %c0_i32_1 = arith.constant 0 : i32
    return %c0_i32, %c0_i32_0 : i32, i32
  }
  func.func @transform_10(%arg0: i32) -> (i32, i32, i32) {
    %c0_i32 = arith.constant 0 : i32
    %c0_i32_0 = arith.constant 0 : i32
    %c0_i32_1 = arith.constant 0 : i32
    return %arg0, %c0_i32, %c0_i32_0 : i32, i32, i32
  }
}

</mosaic_0001>

<llo_original>
// kernel: tpu_custom_call.1
$region0: #{tpu_custom_call.1}
  #allocation0 [shape = 'u32[]', space=smem, size = 0x4, offset = 0x4, fixed_abs, tag = 'smem constant byte address 0x4 - core index']
  #allocation1 [shape = 'u32[144,128]{1,0:T(1,128)}', space=vmem, size = 0x12000, scoped, tag = 'internal scratch']
  #allocation2 [shape = 'f32[4,290]{1,0:T(4,128)}', space=vmem, size = 0x1800, scoped, tag = 'scratch operand']
  #allocation3 [shape = 'f32[36,256]{1,0:T(8,128)}', space=vmem, size = 0xa000, scoped, tag = 'scratch operand']
  %s0 = inlined_call_operand.vmem [shape: f32[2,16,256], index: 0, kind: input, shape index: {}]
  %s1 = inlined_call_operand.vmem [shape: f32[4,16], index: 1, kind: input, shape index: {}]
  %s2 = inlined_call_operand.vmem [shape: f32[4,1], index: 2, kind: input, shape index: {}]
  %s3 = inlined_call_operand.vmem [shape: f32[4,1], index: 3, kind: input, shape index: {}]
  %s4 = inlined_call_operand.vmem [shape: f32[4,36], index: 4, kind: input, shape index: {}]
  %s5 = inlined_call_operand.vmem [shape: f32[4,1], index: 5, kind: input, shape index: {}]
  %s6 = inlined_call_operand.vmem [shape: f32[4,1], index: 6, kind: input, shape index: {}]
  %s7 = inlined_call_operand.vmem [shape: f32[16,4], index: 7, kind: input, shape index: {}]
  %s8 = inlined_call_operand.vmem [shape: f32[16,1], index: 8, kind: input, shape index: {}]
  %s9 = inlined_call_operand.vmem [shape: f32[16,1], index: 9, kind: input, shape index: {}]
  %s10 = inlined_call_operand.hbm [shape: f32[2,16,256], index: 10, kind: output, shape index: {}]
  %s11 = sld [smem:[#allocation0]]
  $region73: #{tpu_custom_call.1} parent=0
    _
  %s13 = ssub.s32 1, %s11
  %s14 = scalar_select 0, %s13, %s11
  $region1: #{tpu_custom_call.1} parent=0
    #allocation4 [shape = 'u8[32768]{0}', space=vmem, size = 0x8000, scoped, tag = 'output window, operand 0']
    #allocation5 [shape = 's32[2]{0}', space=sflag, size = 0x8, scoped, tag = 'scoped memory for tpu_custom_call.1']
    %15 = vsyncpa [#allocation5], 0
    %s16 = scalar_lea.sflag [#allocation5], 1
    %17 = vsyncpa %s16, 0
    loop: start=0, step=1, limit=4
    $region2: #{tpu_custom_call.1} parent=1 // loop_pre_header
      _
    $region3: #{tpu_custom_call.1} parent=1 // loop_header
      %s19 = sphi 0, %s23
      %p20 = scmp.ge.s32.totalorder %s19, 4
      %s29 = sphi 0, %s31
      %s32 = sphi 0, %s29
      %s33 = sphi 0, %s32
      %s49 = sphi 0, %s33
      %s53 = sphi 0, %s53
      %s55 = sphi 0, %s53
      %s56 = sphi 0, %s55
      %s70 = sphi 0, %s56
      %s74 = sphi 0, %s74
      %s76 = sphi 0, %s74
      %s77 = sphi 0, %s76
      %s91 = sphi 0, %s77
      %s95 = sphi 0, %s95
      %s97 = sphi 0, %s95
      %s98 = sphi 0, %s97
      %s112 = sphi 0, %s98
      %s116 = sphi 0, %s116
      %s118 = sphi 0, %s116
      %s119 = sphi 0, %s118
      %s133 = sphi 0, %s119
      %s137 = sphi 0, %s137
      %s139 = sphi 0, %s137
      %s140 = sphi 0, %s139
      %s154 = sphi 0, %s140
      %s158 = sphi 0, %s158
      %s160 = sphi 0, %s158
      %s161 = sphi 0, %s160
      %s175 = sphi 0, %s161
      %s179 = sphi 0, %s179
      %s181 = sphi 0, %s179
      %s182 = sphi 0, %s181
      %s196 = sphi 0, %s182
      %s200 = sphi 0, %s200
      %s202 = sphi 0, %s200
      %s203 = sphi 0, %s202
      %s217 = sphi 0, %s203
      %s221 = sphi 0, %s221
      %s223 = sphi 0, %s221
      %s224 = sphi 0, %s223
      %s238 = sphi 0, %s224
      %s244 = sphi 0, %s246
      %s247 = sphi 0, %s244
      %s248 = sphi 0, %s247
      %s264 = sphi 0, %s248
    $region4: #{tpu_custom_call.1} parent=1 // loop_header_branch
      %22 = sbr.rel (%p20) target = $region8
    $region5: #{tpu_custom_call.1} parent=1 // loop_body
      %s24 = ssub.s32 %s19, 1
      %s25 = ssub.s32 %s19, 2
      %s26 = sadd.s32 %s19, 1
      %s27 = ssub.s32 %s19, %s26
      %p28 = scmp.eq.s32.totalorder %s27, 0
      %s30 = sadd.s32 %s29, 1
      %s31 = scalar_select %p28, %s29, %s30
      %p34 = pneg %p28
      %p35 = scmp.eq.s32.totalorder %s19, 1
      %p36 = por %p34, %p35
      %p37 = scmp.ne.s32.totalorder %s29, %s32
      %p38 = scmp.eq.s32.totalorder %s19, 0
      %p39 = por %p37, %p38
      %p40 = scmp.ne.s32.totalorder %s29, %s32
      %p41 = scmp.eq.s32.totalorder %s24, 1
      %p42 = por %p40, %p41
      %p43 = scmp.ne.s32.totalorder %s32, %s33
      %p44 = scmp.eq.s32.totalorder %s24, 0
      %p45 = por %p43, %p44
      %p46 = scmp.ne.s32.totalorder %s32, %s33
      %p47 = scmp.eq.s32.totalorder %s25, 1
      %p48 = por %p46, %p47
      %p50 = scmp.ne.s32.totalorder %s33, %s49
      %p51 = scmp.eq.s32.totalorder %s25, 0
      %p52 = por %p50, %p51
      %s54 = sadd.s32 %s53, 1
      %p57 = scmp.eq.s32.totalorder %s19, 1
      %p58 = scmp.ne.s32.totalorder %s53, %s55
      %p59 = scmp.eq.s32.totalorder %s19, 0
      %p60 = por %p58, %p59
      %p61 = scmp.ne.s32.totalorder %s53, %s55
      %p62 = scmp.eq.s32.totalorder %s24, 1
      %p63 = por %p61, %p62
      %p64 = scmp.ne.s32.totalorder %s55, %s56
      %p65 = scmp.eq.s32.totalorder %s24, 0
      %p66 = por %p64, %p65
      %p67 = scmp.ne.s32.totalorder %s55, %s56
      %p68 = scmp.eq.s32.totalorder %s25, 1
      %p69 = por %p67, %p68
      %p71 = scmp.ne.s32.totalorder %s56, %s70
      %p72 = scmp.eq.s32.totalorder %s25, 0
      %p73 = por %p71, %p72
      %s75 = sadd.s32 %s74, 1
      %p78 = scmp.eq.s32.totalorder %s19, 1
      %p79 = scmp.ne.s32.totalorder %s74, %s76
      %p80 = scmp.eq.s32.totalorder %s19, 0
      %p81 = por %p79, %p80
      %p82 = scmp.ne.s32.totalorder %s74, %s76
      %p83 = scmp.eq.s32.totalorder %s24, 1
      %p84 = por %p82, %p83
      %p85 = scmp.ne.s32.totalorder %s76, %s77
      %p86 = scmp.eq.s32.totalorder %s24, 0
      %p87 = por %p85, %p86
      %p88 = scmp.ne.s32.totalorder %s76, %s77
      %p89 = scmp.eq.s32.totalorder %s25, 1
      %p90 = por %p88, %p89
      %p92 = scmp.ne.s32.totalorder %s77, %s91
      %p93 = scmp.eq.s32.totalorder %s25, 0
      %p94 = por %p92, %p93
      %s96 = sadd.s32 %s95, 1
      %p99 = scmp.eq.s32.totalorder %s19, 1
      %p100 = scmp.ne.s32.totalorder %s95, %s97
      %p101 = scmp.eq.s32.totalorder %s19, 0
      %p102 = por %p100, %p101
      %p103 = scmp.ne.s32.totalorder %s95, %s97
      %p104 = scmp.eq.s32.totalorder %s24, 1
      %p105 = por %p103, %p104
      %p106 = scmp.ne.s32.totalorder %s97, %s98
      %p107 = scmp.eq.s32.totalorder %s24, 0
      %p108 = por %p106, %p107
      %p109 = scmp.ne.s32.totalorder %s97, %s98
      %p110 = scmp.eq.s32.totalorder %s25, 1
      %p111 = por %p109, %p110
      %p113 = scmp.ne.s32.totalorder %s98, %s112
      %p114 = scmp.eq.s32.totalorder %s25, 0
      %p115 = por %p113, %p114
      %s117 = sadd.s32 %s116, 1
      %p120 = scmp.eq.s32.totalorder %s19, 1
      %p121 = scmp.ne.s32.totalorder %s116, %s118
      %p122 = scmp.eq.s32.totalorder %s19, 0
      %p123 = por %p121, %p122
      %p124 = scmp.ne.s32.totalorder %s116, %s118
      %p125 = scmp.eq.s32.totalorder %s24, 1
      %p126 = por %p124, %p125
      %p127 = scmp.ne.s32.totalorder %s118, %s119
      %p128 = scmp.eq.s32.totalorder %s24, 0
      %p129 = por %p127, %p128
      %p130 = scmp.ne.s32.totalorder %s118, %s119
      %p131 = scmp.eq.s32.totalorder %s25, 1
      %p132 = por %p130, %p131
      %p134 = scmp.ne.s32.totalorder %s119, %s133
      %p135 = scmp.eq.s32.totalorder %s25, 0
      %p136 = por %p134, %p135
      %s138 = sadd.s32 %s137, 1
      %p141 = scmp.eq.s32.totalorder %s19, 1
      %p142 = scmp.ne.s32.totalorder %s137, %s139
      %p143 = scmp.eq.s32.totalorder %s19, 0
      %p144 = por %p142, %p143
      %p145 = scmp.ne.s32.totalorder %s137, %s139
      %p146 = scmp.eq.s32.totalorder %s24, 1
      %p147 = por %p145, %p146
      %p148 = scmp.ne.s32.totalorder %s139, %s140
      %p149 = scmp.eq.s32.totalorder %s24, 0
      %p150 = por %p148, %p149
      %p151 = scmp.ne.s32.totalorder %s139, %s140
      %p152 = scmp.eq.s32.totalorder %s25, 1
      %p153 = por %p151, %p152
      %p155 = scmp.ne.s32.totalorder %s140, %s154
      %p156 = scmp.eq.s32.totalorder %s25, 0
      %p157 = por %p155, %p156
      %s159 = sadd.s32 %s158, 1
      %p162 = scmp.eq.s32.totalorder %s19, 1
      %p163 = scmp.ne.s32.totalorder %s158, %s160
      %p164 = scmp.eq.s32.totalorder %s19, 0
      %p165 = por %p163, %p164
      %p166 = scmp.ne.s32.totalorder %s158, %s160
      %p167 = scmp.eq.s32.totalorder %s24, 1
      %p168 = por %p166, %p167
      %p169 = scmp.ne.s32.totalorder %s160, %s161
      %p170 = scmp.eq.s32.totalorder %s24, 0
      %p171 = por %p169, %p170
      %p172 = scmp.ne.s32.totalorder %s160, %s161
      %p173 = scmp.eq.s32.totalorder %s25, 1
      %p174 = por %p172, %p173
      %p176 = scmp.ne.s32.totalorder %s161, %s175
      %p177 = scmp.eq.s32.totalorder %s25, 0
      %p178 = por %p176, %p177
      %s180 = sadd.s32 %s179, 1
      %p183 = scmp.eq.s32.totalorder %s19, 1
      %p184 = scmp.ne.s32.totalorder %s179, %s181
      %p185 = scmp.eq.s32.totalorder %s19, 0
      %p186 = por %p184, %p185
      %p187 = scmp.ne.s32.totalorder %s179, %s181
      %p188 = scmp.eq.s32.totalorder %s24, 1
      %p189 = por %p187, %p188
      %p190 = scmp.ne.s32.totalorder %s181, %s182
      %p191 = scmp.eq.s32.totalorder %s24, 0
      %p192 = por %p190, %p191
      %p193 = scmp.ne.s32.totalorder %s181, %s182
      %p194 = scmp.eq.s32.totalorder %s25, 1
      %p195 = por %p193, %p194
      %p197 = scmp.ne.s32.totalorder %s182, %s196
      %p198 = scmp.eq.s32.totalorder %s25, 0
      %p199 = por %p197, %p198
      %s201 = sadd.s32 %s200, 1
      %p204 = scmp.eq.s32.totalorder %s19, 1
      %p205 = scmp.ne.s32.totalorder %s200, %s202
      %p206 = scmp.eq.s32.totalorder %s19, 0
      %p207 = por %p205, %p206
      %p208 = scmp.ne.s32.totalorder %s200, %s202
      %p209 = scmp.eq.s32.totalorder %s24, 1
      %p210 = por %p208, %p209
      %p211 = scmp.ne.s32.totalorder %s202, %s203
      %p212 = scmp.eq.s32.totalorder %s24, 0
      %p213 = por %p211, %p212
      %p214 = scmp.ne.s32.totalorder %s202, %s203
      %p215 = scmp.eq.s32.totalorder %s25, 1
      %p216 = por %p214, %p215
      %p218 = scmp.ne.s32.totalorder %s203, %s217
      %p219 = scmp.eq.s32.totalorder %s25, 0
      %p220 = por %p218, %p219
      %s222 = sadd.s32 %s221, 1
      %p225 = scmp.eq.s32.totalorder %s19, 1
      %p226 = scmp.ne.s32.totalorder %s221, %s223
      %p227 = scmp.eq.s32.totalorder %s19, 0
      %p228 = por %p226, %p227
      %p229 = scmp.ne.s32.totalorder %s221, %s223
      %p230 = scmp.eq.s32.totalorder %s24, 1
      %p231 = por %p229, %p230
      %p232 = scmp.ne.s32.totalorder %s223, %s224
      %p233 = scmp.eq.s32.totalorder %s24, 0
      %p234 = por %p232, %p233
      %p235 = scmp.ne.s32.totalorder %s223, %s224
      %p236 = scmp.eq.s32.totalorder %s25, 1
      %p237 = por %p235, %p236
      %p239 = scmp.ne.s32.totalorder %s224, %s238
      %p240 = scmp.eq.s32.totalorder %s25, 0
      %p241 = por %p239, %p240
      %s242 = ssub.s32 %s19, %s26
      %p243 = scmp.eq.s32.totalorder %s242, 0
      %s245 = sadd.s32 %s244, 1
      %s246 = scalar_select %p243, %s244, %s245
      %p249 = pneg %p243
      %p250 = scmp.eq.s32.totalorder %s19, 1
      %p251 = por %p249, %p250
      %p252 = scmp.ne.s32.totalorder %s244, %s247
      %p253 = scmp.eq.s32.totalorder %s19, 0
      %p254 = por %p252, %p253
      %p255 = scmp.ne.s32.totalorder %s244, %s247
      %p256 = scmp.eq.s32.totalorder %s24, 1
      %p257 = por %p255, %p256
      %p258 = scmp.ne.s32.totalorder %s247, %s248
      %p259 = scmp.eq.s32.totalorder %s24, 0
      %p260 = por %p258, %p259
      %p261 = scmp.ne.s32.totalorder %s247, %s248
      %p262 = scmp.eq.s32.totalorder %s25, 1
      %p263 = por %p261, %p262
      %p265 = scmp.ne.s32.totalorder %s248, %s264
      %p266 = scmp.eq.s32.totalorder %s25, 0
      %p267 = por %p265, %p266
      %p268 = scmp.le.s32.totalorder 1, %s19
      %p269 = scmp.lt.s32.totalorder %s19, 3
      %p270 = pnand %p268, %p269
      %p271 = pneg %p270
      // Predicated region
      $region9: #{tpu_custom_call.1} parent=5 // pred_check
        _
      $region10: #{tpu_custom_call.1} parent=5 // pred_check_branch
        %273 = sbr.rel (%p270) target = $region12
      $region11: #{tpu_custom_call.1} parent=5 // pred_region
        %s274 = ssub.s32 %s19, 1
        // Predicated region
        $region13: #{tpu_custom_call.1} parent=11 // pred_check
          %p275 = pneg %p66
        $region14: #{tpu_custom_call.1} parent=11 // pred_check_branch
          %277 = sbr.rel (%p275) target = $region16
        $region15: #{tpu_custom_call.1} parent=11 // pred_region
          _
        $region16: #{tpu_custom_call.1} parent=11 // pred_fallthru
          _
        // Predicated region
        $region17: #{tpu_custom_call.1} parent=11 // pred_check
          %p278 = pneg %p87
        $region18: #{tpu_custom_call.1} parent=11 // pred_check_branch
          %280 = sbr.rel (%p278) target = $region20
        $region19: #{tpu_custom_call.1} parent=11 // pred_region
          _
        $region20: #{tpu_custom_call.1} parent=11 // pred_fallthru
          _
        // Predicated region
        $region21: #{tpu_custom_call.1} parent=11 // pred_check
          %p281 = pneg %p108
        $region22: #{tpu_custom_call.1} parent=11 // pred_check_branch
          %283 = sbr.rel (%p281) target = $region24
        $region23: #{tpu_custom_call.1} parent=11 // pred_region
          _
        $region24: #{tpu_custom_call.1} parent=11 // pred_fallthru
          _
        // Predicated region
        $region25: #{tpu_custom_call.1} parent=11 // pred_check
          %p284 = pneg %p129
        $region26: #{tpu_custom_call.1} parent=11 // pred_check_branch
          %286 = sbr.rel (%p284) target = $region28
        $region27: #{tpu_custom_call.1} parent=11 // pred_region
          _
        $region28: #{tpu_custom_call.1} parent=11 // pred_fallthru
          _
        // Predicated region
        $region29: #{tpu_custom_call.1} parent=11 // pred_check
          %p287 = pneg %p150
        $region30: #{tpu_custom_call.1} parent=11 // pred_check_branch
          %289 = sbr.rel (%p287) target = $region32
        $region31: #{tpu_custom_call.1} parent=11 // pred_region
          _
        $region32: #{tpu_custom_call.1} parent=11 // pred_fallthru
          _
        // Predicated region
        $region33: #{tpu_custom_call.1} parent=11 // pred_check
          %p290 = pneg %p171
        $region34: #{tpu_custom_call.1} parent=11 // pred_check_branch
          %292 = sbr.rel (%p290) target = $region36
        $region35: #{tpu_custom_call.1} parent=11 // pred_region
          _
        $region36: #{tpu_custom_call.1} parent=11 // pred_fallthru
          _
        // Predicated region
        $region37: #{tpu_custom_call.1} parent=11 // pred_check
          %p293 = pneg %p192
        $region38: #{tpu_custom_call.1} parent=11 // pred_check_branch
          %295 = sbr.rel (%p293) target = $region40
        $region39: #{tpu_custom_call.1} parent=11 // pred_region
          _
        $region40: #{tpu_custom_call.1} parent=11 // pred_fallthru
          _
        // Predicated region
        $region41: #{tpu_custom_call.1} parent=11 // pred_check
          %p296 = pneg %p213
        $region42: #{tpu_custom_call.1} parent=11 // pred_check_branch
          %298 = sbr.rel (%p296) target = $region44
        $region43: #{tpu_custom_call.1} parent=11 // pred_region
          _
        $region44: #{tpu_custom_call.1} parent=11 // pred_fallthru
          _
        // Predicated region
        $region45: #{tpu_custom_call.1} parent=11 // pred_check
          %p299 = pneg %p234
        $region46: #{tpu_custom_call.1} parent=11 // pred_check_branch
          %301 = sbr.rel (%p299) target = $region48
        $region47: #{tpu_custom_call.1} parent=11 // pred_region
          _
        $region48: #{tpu_custom_call.1} parent=11 // pred_fallthru
          _
      $region12: #{tpu_custom_call.1} parent=5 // pred_fallthru
        _
      %p302 = scmp.lt.s32.totalorder %s19, 2
      // Predicated region
      $region49: #{tpu_custom_call.1} parent=5 // pred_check
        %p303 = pneg %p302
      $region50: #{tpu_custom_call.1} parent=5 // pred_check_branch
        %305 = sbr.rel (%p303) target = $region52
      $region51: #{tpu_custom_call.1} parent=5 // pred_region
        // Predicated region
        $region53: #{tpu_custom_call.1} parent=51 // pred_check
          %p306 = pneg %p39
        $region54: #{tpu_custom_call.1} parent=51 // pred_check_branch
          %308 = sbr.rel (%p306) target = $region56
        $region55: #{tpu_custom_call.1} parent=51 // pred_region
          %p309 = scmp.lt.s32.totalorder %s19, 1
          %s310 = scalar_select %p309, %s19, 1
          %s311 = smul.addr %s310, 4
          %s312 = smul.addr %s311, 8
          %s313 = scalar_lea.vmem %s0, %s312
        $region56: #{tpu_custom_call.1} parent=51 // pred_fallthru
          _
      $region52: #{tpu_custom_call.1} parent=5 // pred_fallthru
        _
      %p314 = scmp.le.s32.totalorder 1, %s19
      %p315 = scmp.lt.s32.totalorder %s19, 3
      %p316 = pnand %p314, %p315
      %p317 = pneg %p316
      // Predicated region
      $region57: #{tpu_custom_call.1} parent=5 // pred_check
        _
      $region58: #{tpu_custom_call.1} parent=5 // pred_check_branch
        %319 = sbr.rel (%p316) target = $region60
      $region59: #{tpu_custom_call.1} parent=5 // pred_region
        %s320 = ssub.s32 %s19, 1
        %p321 = scmp.lt.s32.totalorder %s24, 1
        %s322 = scalar_select %p321, %s24, 1
        %s323 = smul.addr %s322, 4
        %s324 = smul.addr %s323, 8
        %s325 = scalar_lea.vmem %s0, %s324
        %p326 = pneg %p45
        %p327 = pneg %p42
        %p328 = pneg %p66
        %p329 = pneg %p63
        %p330 = pneg %p87
        %p331 = pneg %p84
        %p332 = pneg %p108
        %p333 = pneg %p105
        %p334 = pneg %p129
        %p335 = pneg %p126
        %p336 = pneg %p150
        %p337 = pneg %p147
        %p338 = pneg %p171
        %p339 = pneg %p168
        %p340 = pneg %p192
        %p341 = pneg %p189
        %p342 = pneg %p213
        %p343 = pneg %p210
        %p344 = pneg %p234
        %p345 = pneg %p231
        %p346 = pneg %p260
        %p347 = pneg %p257
        %s348 = sand.u32 %s247, 1
        %s349 = scalar_lea.sflag [#allocation5], %s348
        %s350 = sand.u32 %s247, 1
        %s351 = smul.addr %s350, 32
        %s352 = scalar_lea.vmem [#allocation4], %s351
        %p353 = scmp.lt.s32.totalorder %s24, 1
        %s354 = scalar_select %p353, %s24, 1
        %s355 = smul.addr %s354, 4
        %s356 = smul.addr %s355, 8
        %s357 = scalar_lea.vmem %s0, %s356
        %v358 = vld [vmem:[%s357] sm:$0xff]
        %v359 = vld [vmem:[%s357 + $0x8] sm:$0xff]
        %v360 = vld [vmem:[%s357 + $0x10] sm:$0xff]
        %v361 = vld [vmem:[%s357 + $0x18] sm:$0xff]
        %v362 = vld [vmem:[%s1] sm:$0xf]
        %vm363 = vcmask 130048
        %v365 = vsel %vm363, %v362, 0
        %367 = vmatprep.subr.mxu0 0.0
        %368 = vmatpush1.msra.mxu0 0.0
        %369 = vmatprep.subr.mxu0 0.0
        %370 = vmatpush1.msra.mxu0 0.0
        %371 = vmatprep.subr.mxu0 0.0
        %372 = vmatpush1.msra.mxu0 0.0
        %373 = vmatprep.subr.mxu0 0.0
        %374 = vmatpush1.msra.mxu0 0.0
        %375 = vmatprep.subr.mxu0 0.0
        %376 = vmatpush1.msra.mxu0 0.0
        %377 = vmatprep.subr.mxu0 0.0
        %378 = vmatpush1.msra.mxu0 0.0
        %379 = vmatprep.subr.mxu0 0.0
        %380 = vmatpush1.msra.mxu0 0.0
        %381 = vmatprep.subr.mxu0 0.0
        %382 = vmatpush1.msra.mxu0 0.0
        %383 = vmatprep.subr.mxu0 0.0
        %384 = vmatpush1.msra.mxu0 0.0
        %385 = vmatprep.subr.mxu0 0.0
        %386 = vmatpush1.msra.mxu0 0.0
        %387 = vmatprep.subr.mxu0 0.0
        %388 = vmatpush1.msra.mxu0 0.0
        %389 = vmatprep.subr.mxu0 0.0
        %390 = vmatpush1.msra.mxu0 0.0
        %391 = vmatprep.subr.mxu0 0.0
        %392 = vmatpush1.msra.mxu0 0.0
        %393 = vmatprep.subr.mxu0 0.0
        %394 = vmatpush1.msra.mxu0 0.0
        %395 = vmatprep.subr.mxu0 %v361
        %396 = vmatpush1.msra.mxu0 %v360
        %397 = vmatprep.subr.mxu0 %v359
        %398 = vmatpush1.msra.mxu0 %v358
        %399 = vmatprep.subr.mxu0 0.0
        %400 = vmatpush2.msra.mxu0 0.0
        %401 = vmatprep.subr.mxu0 0.0
        %402 = vmatpush2.msra.mxu0 0.0
        %403 = vmatprep.subr.mxu0 0.0
        %404 = vmatpush2.msra.mxu0 0.0
        %405 = vmatprep.subr.mxu0 0.0
        %406 = vmatpush2.msra.mxu0 0.0
        %407 = vmatprep.subr.mxu0 0.0
        %408 = vmatpush2.msra.mxu0 0.0
        %409 = vmatprep.subr.mxu0 0.0
        %410 = vmatpush2.msra.mxu0 0.0
        %411 = vmatprep.subr.mxu0 0.0
        %412 = vmatpush2.msra.mxu0 0.0
        %413 = vmatprep.subr.mxu0 0.0
        %414 = vmatpush2.msra.mxu0 0.0
        %415 = vmatprep.subr.mxu0 0.0
        %416 = vmatpush2.msra.mxu0 0.0
        %417 = vmatprep.subr.mxu0 0.0
        %418 = vmatpush2.msra.mxu0 0.0
        %419 = vmatprep.subr.mxu0 0.0
        %420 = vmatpush2.msra.mxu0 0.0
        %421 = vmatprep.subr.mxu0 0.0
        %422 = vmatpush2.msra.mxu0 0.0
        %423 = vmatprep.subr.mxu0 0.0
        %424 = vmatpush2.msra.mxu0 0.0
        %425 = vmatprep.subr.mxu0 0.0
        %426 = vmatpush2.msra.mxu0 0.0
        %427 = vmatprep.subr.mxu0 0.0
        %428 = vmatpush2.msra.mxu0 0.0
        %429 = vmatprep.subr.mxu0 0.0
        %430 = vmatpush2.msra.mxu0 0.0
        %431 = vmatprep.mubr.f32.mxu0 0.0
        %432 = vmatmul.mubr.f32.gmra.mxu0 %v365
        %v433 = vpop.f32.mrf.mxu0
        %v434 = vadd.f32 0.0, %v433
        %v435 = vpop.f32.mrf.mxu0
        %v436 = vadd.f32 0.0, %v435
        %437 = vdwg.mxu0
        %v438 = vld [vmem:[%s2] sm:$0xf]
        %440 = vset.pattern.permute.xlu0 0
        %441 = vperm.xlu0 %440, %v438
        %v442 = vpop.permute.xlu0 %441
        %v444 = vmul.f32 %v434, %v442
        %v445 = vmul.f32 %v436, %v442
        %v446 = vld [vmem:[%s3] sm:$0xf]
        %448 = vset.pattern.permute.xlu0 0
        %449 = vperm.xlu0 %448, %v446
        %v450 = vpop.permute.xlu0 %449
        %v452 = vadd.f32 %v444, %v450
        %v453 = vadd.f32 %v445, %v450
        %v454 = vmax.f32 %v452, 0.0
        %v455 = vmax.f32 %v453, 0.0
        %vm456 = vcmask 134144
        %457 = vst.msk [vmem:[#allocation2] sm:$0xf] %vm456, 0.0
        %vm458 = vcmask 273544
        %459 = vst.msk [vmem:[#allocation2 + $0x8] sm:$0xf] %vm458, 0.0
        %v462 = vcombine.low %v454, %v455
        %463 = vrot.lane.b32.xlu0 %v462, 17
        %v464 = vpop.permute.xlu0 %463
        %v465 = vrot.slane %v464, 4
        %vm466 = vcmask 138240
        %v467 = vsel %vm466, %v465, %v464
        %vm470 = vcmask 1043592
        %vm471 = vcmask 1047556
        %vm472 = vmor %vm471, %vm470
        %473 = vst.msk [vmem:[#allocation2] sm:$0xff] %vm472, %v467
        %474 = vst.msk [vmem:[#allocation2 + $0x8] sm:$0xf] %vm456, %v465
        %v475 = vlaneseq
        %v476 = vand.u32 %v475, 127
        %v477 = vadd.s32 %v476, 128
        %vm478 = vcmp.lt.s32.totalorder %v476, 0
        %v479 = vsub.s32 0, %v476
        %v480 = vsel %vm478, %v479, %v476
        %v481 = vshrl.u32 %v480, 4
        %v482 = vand.u32 %v480, 15
        %v483 = vsub.s32 0, %v482
        %v484 = vsel %vm478, %v483, %v482
        %vm485 = vcmp.lt.s32.totalorder %v477, 0
        %v486 = vsub.s32 0, %v477
        %v487 = vsel %vm485, %v486, %v477
        %v488 = vshrl.u32 %v487, 4
        %v489 = vand.u32 %v487, 15
        %v490 = vsub.s32 0, %v489
        %v491 = vsel %vm485, %v490, %v489
        %vm492 = vcmp.ne.s32.totalorder %v484, 0
        %vm493 = vcmp.ne.s32.totalorder %v491, 0
        %vm494 = vcmp.lt.s32.totalorder %v484, 0
        %vm495 = vcmp.lt.s32.totalorder %v491, 0
        %vm496 = vmand %vm494, %vm492
        %vm497 = vmand %vm495, %vm493
        %v498 = vadd.s32 %v484, 16
        %v499 = vadd.s32 %v491, 16
        %v500 = vsel %vm496, %v498, %v484
        %v501 = vsel %vm497, %v499, %v491
        %v502 = vld [vmem:[#allocation2] sm:$0xff]
        %vm503 = vcmp.ge.s32.totalorder %v500, 1
        %vm504 = vcmp.ge.s32.totalorder %v501, 1
        %v505 = vsel %vm503, 1, 0
        %v506 = vsel %vm504, 1, 0
        %vm507 = vcmp.eq.s32.totalorder %v505, 1
        %vm508 = vcmp.eq.s32.totalorder %v506, 1
        %v510 = vcombine.high %v502, %v502
        %v512 = vsel %vm507, %v502, 0.0
        %v513 = vsel %vm508, %v510, 0.0
        %514 = vst [vmem:[#allocation3] sm:$0xf] %v512
        %515 = vst [vmem:[#allocation3 + $0x8] sm:$0xf] %v513
        %v516 = vld [vmem:[#allocation2] sm:$0xff]
        %v517 = vld [vmem:[#allocation2 + $0x8] sm:$0xf]
        %v520 = vcombine.low %v516, %v516
        %v521 = vcombine.low %v517, %v517
        %522 = vrot.lane.b32.xlu0 %v520, 127
        %v523 = vpop.permute.xlu0 %522
        %524 = vrot.lane.b32.xlu0 %v516, 127
        %v525 = vpop.permute.xlu0 %524
        %526 = vrot.lane.b32.xlu0 %v521, 127
        %v527 = vpop.permute.xlu0 %526
        %vm528 = vcmask 1039360
        %v529 = vsel %vm528, %v523, %v525
        %v530 = vsel %vm528, %v525, %v527
        %533 = vst [vmem:[#allocation3] sm:$0xf0] %v529
        %534 = vst [vmem:[#allocation3 + $0x8] sm:$0xf0] %v530
        %v535 = vld [vmem:[#allocation2] sm:$0xff]
        %v536 = vld [vmem:[#allocation2 + $0x8] sm:$0xf]
        %vm537 = vcmp.le.s32.totalorder %v500, 14
        %vm538 = vcmp.le.s32.totalorder %v501, 14
        %v539 = vsel %vm537, 1, 0
        %v540 = vsel %vm538, 1, 0
        %vm541 = vcmp.eq.s32.totalorder %v539, 1
        %vm542 = vcmp.eq.s32.totalorder %v540, 1
        %v545 = vcombine.high %v535, %v535
        %546 = vrot.lane.b32.xlu0 %v535, 126
        %v547 = vpop.permute.xlu0 %546
        %548 = vrot.lane.b32.xlu0 %v545, 126
        %v549 = vpop.permute.xlu0 %548
        %550 = vrot.lane.b32.xlu0 %v536, 126
        %v551 = vpop.permute.xlu0 %550
        %vm552 = vcmask 1031168
        %v553 = vsel %vm552, %v547, %v549
        %v554 = vsel %vm552, %v549, %v551
        %v557 = vsel %vm541, %v553, 0.0
        %v558 = vsel %vm542, %v554, 0.0
        %559 = vst [vmem:[#allocation3 + $0x10] sm:$0xf] %v557
        %560 = vst [vmem:[#allocation3 + $0x18] sm:$0xf] %v558
        %v561 = vld [vmem:[#allocation2] sm:$0xff]
        %v562 = vld [vmem:[#allocation2 + $0x8] sm:$0xf]
        %v565 = vcombine.high %v561, %v561
        %566 = vrot.lane.b32.xlu0 %v561, 112
        %v567 = vpop.permute.xlu0 %566
        %568 = vrot.lane.b32.xlu0 %v565, 112
        %v569 = vpop.permute.xlu0 %568
        %570 = vrot.lane.b32.xlu0 %v562, 112
        %v571 = vpop.permute.xlu0 %570
        %vm572 = vcmask 916480
        %v573 = vsel %vm572, %v567, %v569
        %v574 = vsel %vm572, %v569, %v571
        %v577 = vsel %vm507, %v573, 0.0
        %v578 = vsel %vm508, %v574, 0.0
        %v581 = vrot.slane %v577, 4
        %v582 = vrot.slane %v578, 4
        %585 = vst [vmem:[#allocation3 + $0x10] sm:$0xf0] %v581
        %586 = vst [vmem:[#allocation3 + $0x18] sm:$0xf0] %v582
        %v587 = vld [vmem:[#allocation2] sm:$0xff]
        %v588 = vld [vmem:[#allocation2 + $0x8] sm:$0xf]
        %v591 = vcombine.high %v587, %v587
        %592 = vrot.lane.b32.xlu0 %v587, 111
        %v593 = vpop.permute.xlu0 %592
        %594 = vrot.lane.b32.xlu0 %v591, 111
        %v595 = vpop.permute.xlu0 %594
        %596 = vrot.lane.b32.xlu0 %v588, 111
        %v597 = vpop.permute.xlu0 %596
        %vm598 = vcmask 908288
        %v599 = vsel %vm598, %v593, %v595
        %v600 = vsel %vm598, %v595, %v597
        %603 = vst [vmem:[#allocation3 + $0x20] sm:$0xf] %v599
        %604 = vst [vmem:[#allocation3 + $0x28] sm:$0xf] %v600
        %v605 = vld [vmem:[#allocation2] sm:$0xff]
        %v606 = vld [vmem:[#allocation2 + $0x8] sm:$0xf]
        %v609 = vcombine.high %v605, %v605
        %610 = vrot.lane.b32.xlu0 %v605, 110
        %v611 = vpop.permute.xlu0 %610
        %612 = vrot.lane.b32.xlu0 %v609, 110
        %v613 = vpop.permute.xlu0 %612
        %614 = vrot.lane.b32.xlu0 %v606, 110
        %v615 = vpop.permute.xlu0 %614
        %vm616 = vcmask 900096
        %v617 = vsel %vm616, %v611, %v613
        %v618 = vsel %vm616, %v613, %v615
        %v621 = vsel %vm541, %v617, 0.0
        %v622 = vsel %vm542, %v618, 0.0
        %v625 = vrot.slane %v621, 4
        %v626 = vrot.slane %v622, 4
        %629 = vst [vmem:[#allocation3 + $0x20] sm:$0xf0] %v625
        %630 = vst [vmem:[#allocation3 + $0x28] sm:$0xf0] %v626
        %v631 = vld [vmem:[#allocation2] sm:$0xff]
        %v632 = vld [vmem:[#allocation2 + $0x8] sm:$0xf]
        %v635 = vcombine.high %v631, %v631
        %636 = vrot.lane.b32.xlu0 %v631, 96
        %v637 = vpop.permute.xlu0 %636
        %638 = vrot.lane.b32.xlu0 %v635, 96
        %v639 = vpop.permute.xlu0 %638
        %640 = vrot.lane.b32.xlu0 %v632, 96
        %v641 = vpop.permute.xlu0 %640
        %vm642 = vcmask 785408
        %v643 = vsel %vm642, %v637, %v639
        %v644 = vsel %vm642, %v639, %v641
        %v647 = vsel %vm507, %v643, 0.0
        %v648 = vsel %vm508, %v644, 0.0
        %649 = vst [vmem:[#allocation3 + $0x30] sm:$0xf] %v647
        %650 = vst [vmem:[#allocation3 + $0x38] sm:$0xf] %v648
        %v651 = vld [vmem:[#allocation2] sm:$0xff]
        %v652 = vld [vmem:[#allocation2 + $0x8] sm:$0xf]
        %v655 = vcombine.low %v651, %v651
        %v656 = vcombine.low %v652, %v652
        %657 = vrot.lane.b32.xlu0 %v655, 95
        %v658 = vpop.permute.xlu0 %657
        %659 = vrot.lane.b32.xlu0 %v651, 95
        %v660 = vpop.permute.xlu0 %659
        %661 = vrot.lane.b32.xlu0 %v656, 95
        %v662 = vpop.permute.xlu0 %661
        %vm663 = vcmask 777216
        %v664 = vsel %vm663, %v658, %v660
        %v665 = vsel %vm663, %v660, %v662
        %668 = vst [vmem:[#allocation3 + $0x30] sm:$0xf0] %v664
        %669 = vst [vmem:[#allocation3 + $0x38] sm:$0xf0] %v665
        %v670 = vld [vmem:[#allocation2] sm:$0xff]
        %v671 = vld [vmem:[#allocation2 + $0x8] sm:$0xf]
        %v674 = vcombine.high %v670, %v670
        %675 = vrot.lane.b32.xlu0 %v670, 94
        %v676 = vpop.permute.xlu0 %675
        %677 = vrot.lane.b32.xlu0 %v674, 94
        %v678 = vpop.permute.xlu0 %677
        %679 = vrot.lane.b32.xlu0 %v671, 94
        %v680 = vpop.permute.xlu0 %679
        %vm681 = vcmask 769024
        %v682 = vsel %vm681, %v676, %v678
        %v683 = vsel %vm681, %v678, %v680
        %v686 = vsel %vm541, %v682, 0.0
        %v687 = vsel %vm542, %v683, 0.0
        %688 = vst [vmem:[#allocation3 + $0x40] sm:$0xf] %v686
        %689 = vst [vmem:[#allocation3 + $0x48] sm:$0xf] %v687
        %v690 = vld [vmem:[%s4] sm:$0xf]
        %v691 = vld [vmem:[#allocation3] sm:$0xff]
        %v692 = vld [vmem:[#allocation3 + $0x8] sm:$0xff]
        %v693 = vld [vmem:[#allocation3 + $0x10] sm:$0xff]
        %v694 = vld [vmem:[#allocation3 + $0x18] sm:$0xff]
        %v695 = vld [vmem:[#allocation3 + $0x20] sm:$0xff]
        %v696 = vld [vmem:[#allocation3 + $0x28] sm:$0xff]
        %v697 = vld [vmem:[#allocation3 + $0x30] sm:$0xff]
        %v698 = vld [vmem:[#allocation3 + $0x38] sm:$0xff]
        %v699 = vld [vmem:[#allocation3 + $0x40] sm:$0xf]
        %v700 = vld [vmem:[#allocation3 + $0x48] sm:$0xf]
        %vm701 = vcmask 293888
        %v703 = vsel %vm701, %v690, 0
        %vm705 = vcmask 1043456
        %v707 = vsel %vm705, %v699, 0
        %v710 = vsel %vm705, %v700, 0
        %712 = vmatprep.subr.mxu0 0.0
        %713 = vmatpush1.msra.mxu0 0.0
        %714 = vmatprep.subr.mxu0 0.0
        %715 = vmatpush1.msra.mxu0 0.0
        %716 = vmatprep.subr.mxu0 0.0
        %717 = vmatpush1.msra.mxu0 0.0
        %718 = vmatprep.subr.mxu0 0.0
        %719 = vmatpush1.msra.mxu0 0.0
        %720 = vmatprep.subr.mxu0 0.0
        %721 = vmatpush1.msra.mxu0 0.0
        %722 = vmatprep.subr.mxu0 0.0
        %723 = vmatpush1.msra.mxu0 0.0
        %724 = vmatprep.subr.mxu0 0.0
        %725 = vmatpush1.msra.mxu0 0.0
        %726 = vmatprep.subr.mxu0 0.0
        %727 = vmatpush1.msra.mxu0 0.0
        %728 = vmatprep.subr.mxu0 0.0
        %729 = vmatpush1.msra.mxu0 0.0
        %730 = vmatprep.subr.mxu0 0.0
        %731 = vmatpush1.msra.mxu0 0.0
        %732 = vmatprep.subr.mxu0 0.0
        %733 = vmatpush1.msra.mxu0 0.0
        %734 = vmatprep.subr.mxu0 %v710
        %735 = vmatpush1.msra.mxu0 %v707
        %736 = vmatprep.subr.mxu0 %v698
        %737 = vmatpush1.msra.mxu0 %v697
        %738 = vmatprep.subr.mxu0 %v696
        %739 = vmatpush1.msra.mxu0 %v695
        %740 = vmatprep.subr.mxu0 %v694
        %741 = vmatpush1.msra.mxu0 %v693
        %742 = vmatprep.subr.mxu0 %v692
        %743 = vmatpush1.msra.mxu0 %v691
        %744 = vmatprep.subr.mxu0 0.0
        %745 = vmatpush2.msra.mxu0 0.0
        %746 = vmatprep.subr.mxu0 0.0
        %747 = vmatpush2.msra.mxu0 0.0
        %748 = vmatprep.subr.mxu0 0.0
        %749 = vmatpush2.msra.mxu0 0.0
        %750 = vmatprep.subr.mxu0 0.0
        %751 = vmatpush2.msra.mxu0 0.0
        %752 = vmatprep.subr.mxu0 0.0
        %753 = vmatpush2.msra.mxu0 0.0
        %754 = vmatprep.subr.mxu0 0.0
        %755 = vmatpush2.msra.mxu0 0.0
        %756 = vmatprep.subr.mxu0 0.0
        %757 = vmatpush2.msra.mxu0 0.0
        %758 = vmatprep.subr.mxu0 0.0
        %759 = vmatpush2.msra.mxu0 0.0
        %760 = vmatprep.subr.mxu0 0.0
        %761 = vmatpush2.msra.mxu0 0.0
        %762 = vmatprep.subr.mxu0 0.0
        %763 = vmatpush2.msra.mxu0 0.0
        %764 = vmatprep.subr.mxu0 0.0
        %765 = vmatpush2.msra.mxu0 0.0
        %766 = vmatprep.subr.mxu0 0.0
        %767 = vmatpush2.msra.mxu0 0.0
        %768 = vmatprep.subr.mxu0 0.0
        %769 = vmatpush2.msra.mxu0 0.0
        %770 = vmatprep.subr.mxu0 0.0
        %771 = vmatpush2.msra.mxu0 0.0
        %772 = vmatprep.subr.mxu0 0.0
        %773 = vmatpush2.msra.mxu0 0.0
        %774 = vmatprep.subr.mxu0 0.0
        %775 = vmatpush2.msra.mxu0 0.0
        %776 = vmatprep.mubr.f32.mxu0 0.0
        %777 = vmatmul.mubr.f32.gmra.mxu0 %v703
        %v778 = vpop.f32.mrf.mxu0
        %v779 = vadd.f32 0.0, %v778
        %v780 = vpop.f32.mrf.mxu0
        %v781 = vadd.f32 0.0, %v780
        %782 = vdwg.mxu0
        %v783 = vld [vmem:[%s5] sm:$0xf]
        %785 = vset.pattern.permute.xlu0 0
        %786 = vperm.xlu0 %785, %v783
        %v787 = vpop.permute.xlu0 %786
        %v789 = vmul.f32 %v779, %v787
        %v790 = vmul.f32 %v781, %v787
        %v791 = vld [vmem:[%s6] sm:$0xf]
        %793 = vset.pattern.permute.xlu0 0
        %794 = vperm.xlu0 %793, %v791
        %v795 = vpop.permute.xlu0 %794
        %v797 = vadd.f32 %v789, %v795
        %v798 = vadd.f32 %v790, %v795
        %v799 = vmax.f32 %v797, 0.0
        %v800 = vmax.f32 %v798, 0.0
        %v801 = vld [vmem:[%s7] sm:$0xff]
        %v802 = vld [vmem:[%s7 + $0x8] sm:$0xff]
        %vm803 = vcmask 31744
        %v805 = vsel %vm803, %v801, 0
        %v808 = vsel %vm803, %v802, 0
        %v811 = vsel %vm705, %v799, 0
        %v814 = vsel %vm705, %v800, 0
        %816 = vmatprep.subr.mxu0 0.0
        %817 = vmatpush1.msra.mxu0 0.0
        %818 = vmatprep.subr.mxu0 0.0
        %819 = vmatpush1.msra.mxu0 0.0
        %820 = vmatprep.subr.mxu0 0.0
        %821 = vmatpush1.msra.mxu0 0.0
        %822 = vmatprep.subr.mxu0 0.0
        %823 = vmatpush1.msra.mxu0 0.0
        %824 = vmatprep.subr.mxu0 0.0
        %825 = vmatpush1.msra.mxu0 0.0
        %826 = vmatprep.subr.mxu0 0.0
        %827 = vmatpush1.msra.mxu0 0.0
        %828 = vmatprep.subr.mxu0 0.0
        %829 = vmatpush1.msra.mxu0 0.0
        %830 = vmatprep.subr.mxu0 0.0
        %831 = vmatpush1.msra.mxu0 0.0
        %832 = vmatprep.subr.mxu0 0.0
        %833 = vmatpush1.msra.mxu0 0.0
        %834 = vmatprep.subr.mxu0 0.0
        %835 = vmatpush1.msra.mxu0 0.0
        %836 = vmatprep.subr.mxu0 0.0
        %837 = vmatpush1.msra.mxu0 0.0
        %838 = vmatprep.subr.mxu0 0.0
        %839 = vmatpush1.msra.mxu0 0.0
        %840 = vmatprep.subr.mxu0 0.0
        %841 = vmatpush1.msra.mxu0 0.0
        %842 = vmatprep.subr.mxu0 0.0
        %843 = vmatpush1.msra.mxu0 0.0
        %844 = vmatprep.subr.mxu0 0.0
        %845 = vmatpush1.msra.mxu0 0.0
        %846 = vmatprep.subr.mxu0 %v814
        %847 = vmatpush1.msra.mxu0 %v811
        %848 = vmatprep.subr.mxu0 0.0
        %849 = vmatpush2.msra.mxu0 0.0
        %850 = vmatprep.subr.mxu0 0.0
        %851 = vmatpush2.msra.mxu0 0.0
        %852 = vmatprep.subr.mxu0 0.0
        %853 = vmatpush2.msra.mxu0 0.0
        %854 = vmatprep.subr.mxu0 0.0
        %855 = vmatpush2.msra.mxu0 0.0
        %856 = vmatprep.subr.mxu0 0.0
        %857 = vmatpush2.msra.mxu0 0.0
        %858 = vmatprep.subr.mxu0 0.0
        %859 = vmatpush2.msra.mxu0 0.0
        %860 = vmatprep.subr.mxu0 0.0
        %861 = vmatpush2.msra.mxu0 0.0
        %862 = vmatprep.subr.mxu0 0.0
        %863 = vmatpush2.msra.mxu0 0.0
        %864 = vmatprep.subr.mxu0 0.0
        %865 = vmatpush2.msra.mxu0 0.0
        %866 = vmatprep.subr.mxu0 0.0
        %867 = vmatpush2.msra.mxu0 0.0
        %868 = vmatprep.subr.mxu0 0.0
        %869 = vmatpush2.msra.mxu0 0.0
        %870 = vmatprep.subr.mxu0 0.0
        %871 = vmatpush2.msra.mxu0 0.0
        %872 = vmatprep.subr.mxu0 0.0
        %873 = vmatpush2.msra.mxu0 0.0
        %874 = vmatprep.subr.mxu0 0.0
        %875 = vmatpush2.msra.mxu0 0.0
        %876 = vmatprep.subr.mxu0 0.0
        %877 = vmatpush2.msra.mxu0 0.0
        %878 = vmatprep.subr.mxu0 0.0
        %879 = vmatpush2.msra.mxu0 0.0
        %880 = vmatprep.mubr.f32.mxu0 0.0
        %881 = vmatmul.mubr.f32.gmra.mxu0 %v805
        %v882 = vpop.f32.mrf.mxu0
        %v883 = vadd.f32 0.0, %v882
        %v884 = vpop.f32.mrf.mxu0
        %v885 = vadd.f32 0.0, %v884
        %886 = vmatprep.mubr.f32.mxu0 0.0
        %887 = vmatmul.mubr.f32.gmra.mxu0 %v808
        %v888 = vpop.f32.mrf.mxu0
        %v889 = vadd.f32 0.0, %v888
        %v890 = vpop.f32.mrf.mxu0
        %v891 = vadd.f32 0.0, %v890
        %892 = vdwg.mxu0
        %v893 = vld [vmem:[%s8] sm:$0xff]
        %v894 = vld [vmem:[%s8 + $0x8] sm:$0xff]
        %896 = vset.pattern.permute.xlu0 0
        %897 = vperm.xlu0 %896, %v893
        %v898 = vpop.permute.xlu0 %897
        %901 = vset.pattern.permute.xlu0 0
        %902 = vperm.xlu0 %901, %v894
        %v903 = vpop.permute.xlu0 %902
        %v905 = vmul.f32 %v883, %v898
        %v906 = vmul.f32 %v885, %v898
        %v907 = vmul.f32 %v889, %v903
        %v908 = vmul.f32 %v891, %v903
        %v909 = vld [vmem:[%s9] sm:$0xff]
        %v910 = vld [vmem:[%s9 + $0x8] sm:$0xff]
        %912 = vset.pattern.permute.xlu0 0
        %913 = vperm.xlu0 %912, %v909
        %v914 = vpop.permute.xlu0 %913
        %917 = vset.pattern.permute.xlu0 0
        %918 = vperm.xlu0 %917, %v910
        %v919 = vpop.permute.xlu0 %918
        %v921 = vadd.f32 %v905, %v914
        %v922 = vadd.f32 %v906, %v914
        %v923 = vadd.f32 %v907, %v919
        %v924 = vadd.f32 %v908, %v919
        %v925 = vadd.f32 %v921, %v358
        %v926 = vadd.f32 %v922, %v359
        %v927 = vadd.f32 %v923, %v360
        %v928 = vadd.f32 %v924, %v361
        %v929 = vmax.f32 %v925, 0.0
        %v930 = vmax.f32 %v926, 0.0
        %v931 = vmax.f32 %v927, 0.0
        %v932 = vmax.f32 %v928, 0.0
        %933 = vst [vmem:[%s352] sm:$0xff] %v929
        %934 = vst [vmem:[%s352 + $0x8] sm:$0xff] %v930
        %935 = vst [vmem:[%s352 + $0x10] sm:$0xff] %v931
        %936 = vst [vmem:[%s352 + $0x18] sm:$0xff] %v932
        %s937 = sand.u32 %s247, 1
        %s938 = scalar_lea.sflag [#allocation5], %s937
        %s939 = sand.u32 %s247, 1
        %s940 = smul.addr %s939, 32
        %s941 = scalar_lea.vmem [#allocation4], %s940
        // Predicated region
        $region61: #{tpu_custom_call.1} parent=59 // pred_check
          %p942 = pneg %p257
        $region62: #{tpu_custom_call.1} parent=59 // pred_check_branch
          %944 = sbr.rel (%p942) target = $region64
        $region63: #{tpu_custom_call.1} parent=59 // pred_region
          %s946 = ssub.s32 512, 512
          %947 = vsyncadd %s938, %s946
          %s948 = smul.addr %s24, 4
          %s949 = smul.addr %s948, 128
          %s950 = scalar_lea.hbm %s10, %s949
          %s951 = sshll.u32 %s941, 4
          %s952 = int_to_ptr.vmem [resolvable:$true] %s951
          %957 = dma.vmem_to_hbm [thread:$0]  %s952, 512, %s950, %s938, 256, 256, 16
        $region64: #{tpu_custom_call.1} parent=59 // pred_fallthru
          _
      $region60: #{tpu_custom_call.1} parent=5 // pred_fallthru
        _
      %p958 = scmp.le.s32.totalorder 2, %s19
      // Predicated region
      $region65: #{tpu_custom_call.1} parent=5 // pred_check
        %p959 = pneg %p958
      $region66: #{tpu_custom_call.1} parent=5 // pred_check_branch
        %961 = sbr.rel (%p959) target = $region68
      $region67: #{tpu_custom_call.1} parent=5 // pred_region
        %s962 = ssub.s32 %s19, 2
        // Predicated region
        $region69: #{tpu_custom_call.1} parent=67 // pred_check
          %p963 = pneg %p263
        $region70: #{tpu_custom_call.1} parent=67 // pred_check_branch
          %965 = sbr.rel (%p963) target = $region72
        $region71: #{tpu_custom_call.1} parent=67 // pred_region
          %s966 = sand.u32 %s248, 1
          %s967 = scalar_lea.sflag [#allocation5], %s966
          %s968 = sand.u32 %s248, 1
          %s969 = smul.addr %s968, 32
          %s970 = scalar_lea.vmem [#allocation4], %s969
          %971 = dma.done %s967, 512
        $region72: #{tpu_custom_call.1} parent=67 // pred_fallthru
          _
      $region68: #{tpu_custom_call.1} parent=5 // pred_fallthru
        _
    $region6: #{tpu_custom_call.1} parent=1 // loop_footer
      %s23 = sadd.s32 1, %s19
    $region7: #{tpu_custom_call.1} parent=1 // loop_footer_branch
      %18 = sbr.rel target = $region3
    $region8: #{tpu_custom_call.1} parent=1 // loop_exit
      _
    %972 = vsyncpa [#allocation5], 1
    %s973 = scalar_lea.sflag [#allocation5], 1
    %974 = vsyncpa %s973, 1

</llo_original>
